<compile_context>
chip_gen: v6e
topology: v6e:2x2x1
jax: 0.10.0
libtpu: 0.0.40
codegen_flags: <defaults>
</compile_context>

<pallas_src>
import jax
import jax.numpy as jnp
from jax.experimental import pallas as pl
from jax.experimental.pallas import tpu as pltpu


def ifm_kernel(emb_ref, lin_ref, dense_ref,
               w1t_ref, b1_ref, w2t_ref, b2_ref, pt_ref,
               dense_w_ref, bias_ref, out_ref):
    """All activation refs are batch-transposed: [features, TILE_B]."""
    f32 = jnp.float32
    n_fields = pt_ref.shape[0]              # F
    d = emb_ref.shape[0] // n_fields        # embed_dim

    x_bf = emb_ref[...]                     # [F*D, TB] bf16 (MXU input)
    x_f32 = x_bf.astype(f32)                # f32 copy for elementwise FM math

    # ---- FEN: (Linear + ReLU) x2 then P projection, all transposed ---------
    h1 = jnp.dot(w1t_ref[...], x_bf, preferred_element_type=f32) + b1_ref[...]
    h1 = jnp.maximum(h1, 0.0)                                        # [H1, TB]
    ux = jnp.dot(w2t_ref[...], h1.astype(jnp.bfloat16),
                 preferred_element_type=f32) + b2_ref[...]
    ux = jnp.maximum(ux, 0.0)                                        # [H2, TB]
    logits = jnp.dot(pt_ref[...], ux.astype(jnp.bfloat16),
                     preferred_element_type=f32)                     # [F,  TB]

    # ---- mx = F * softmax(logits) over the field (sublane) axis ------------
    m = jnp.max(logits, axis=0, keepdims=True)                       # [1, TB]
    e = jnp.exp(logits - m)                                          # [F, TB]
    inv = pl.reciprocal(jnp.sum(e, axis=0, keepdims=True), approx=True)
    mx = f32(n_fields) * e * inv                                     # [F, TB]

    # ---- FM 2nd-order interaction on mx-reweighted embeddings --------------
    # Per-field unrolled (F is small, static); every op is lane-dense [D, TB].
    sum_v = jnp.zeros((d, x_f32.shape[1]), f32)
    sum_v2 = jnp.zeros_like(sum_v)
    for f in range(n_fields):
        v_f = mx[f:f + 1, :] * x_f32[f * d:(f + 1) * d, :]           # [D, TB]
        sum_v = sum_v + v_f
        sum_v2 = sum_v2 + v_f * v_f
    fm = 0.5 * jnp.sum(sum_v * sum_v - sum_v2, axis=0, keepdims=True)  # [1, TB]

    # ---- IFM linear part (bias=False inside IFMLinear) ---------------------
    lin_sp = jnp.sum(lin_ref[...].astype(f32) * mx, axis=0, keepdims=True)
    lin_dn = jnp.sum(dense_ref[...] * dense_w_ref[...], axis=0, keepdims=True)

    out_ref[...] = lin_sp + lin_dn + fm + bias_ref[...]                # [1, TB]


def ifm_forward(params, sparse_idx, dense_vals, tile_b=16384):
    """sparse_idx: [B, F] int32, dense_vals: [B, Nd] float32 -> [B] float32."""
    B, F = sparse_idx.shape
    D = params["embed_table"].shape[1]
    Nd = dense_vals.shape[1]
    H1 = params["w1"].shape[1]
    H2 = params["w2"].shape[1]

    # --- tile sizing ---------------------------------------------------------
    # Big tiles (default 16K lanes) so each grid step is bandwidth- rather than
    # step-overhead-bound, but capped at ~B/2 (rounded to a 128-lane multiple)
    # so there are >=2 grid tiles whenever B permits (keeps both v7x
    # TensorCores busy; harmless elsewhere).
    half_b = ((pl.cdiv(B, 2) + 127) // 128) * 128
    tile_b = max(128, min(tile_b, half_b))
    n_tiles = pl.cdiv(B, tile_b)
    b_pad = n_tiles * tile_b

    # --- glue: pad the tiny per-sample inputs BEFORE the gather --------------
    if b_pad != B:
        sparse_idx = jnp.pad(sparse_idx, ((0, b_pad - B), (0, 0)))   # idx 0: valid
        dense_vals = jnp.pad(dense_vals, ((0, b_pad - B), (0, 0)))

    # Fused embedding gathers (one table + per-field offsets), bf16 tables so
    # the gather + transpose move half the HBM bytes.
    flat_idx = sparse_idx + params["field_offsets"][None, :]          # [Bp, F]
    emb_tbl = params["embed_table"].astype(jnp.bfloat16)              # [tot, D]
    lin_tbl = params["lin_table"].astype(jnp.bfloat16)                # [tot]
    emb = jnp.take(emb_tbl, flat_idx, axis=0)                         # [Bp, F, D] bf16
    lin = jnp.take(lin_tbl, flat_idx, axis=0)                         # [Bp, F]    bf16

    # --- batch-transposed, lane-dense activation layouts ----------------------
    emb_t = jnp.transpose(emb, (1, 2, 0)).reshape(F * D, b_pad)       # [F*D, Bp] bf16
    lin_t = lin.T                                                     # [F,   Bp] bf16
    dense_t = dense_vals.T                                            # [Nd,  Bp] f32

    # Resident parameters (tiny): pre-transposed, bf16 where they feed the MXU.
    w1t = params["w1"].T.astype(jnp.bfloat16)          # [H1, F*D]
    w2t = params["w2"].T.astype(jnp.bfloat16)          # [H2, H1]
    pt = params["P"].T.astype(jnp.bfloat16)            # [F,  H2]
    b1 = params["b1"].reshape(H1, 1)
    b2 = params["b2"].reshape(H2, 1)
    dense_w = params["dense_w"].reshape(Nd, 1)
    bias = params["bias"].reshape(1, 1)

    def act(rows):
        if n_tiles >= 3:
            # Deeper input pipelining hides DMA start latency when the grid is
            # long enough for it to matter (per-tile compute is short).
            return pl.BlockSpec((rows, tile_b), lambda i: (0, i),
                                pipeline_mode=pl.Buffered(3))
        return pl.BlockSpec((rows, tile_b), lambda i: (0, i))

    res = lambda shape: pl.BlockSpec(shape, lambda i: (0, 0))          # resident

    out = pl.pallas_call(
        ifm_kernel,
        out_shape=jax.ShapeDtypeStruct((1, b_pad), jnp.float32),
        grid=(n_tiles,),
        in_specs=[act(F * D), act(F), act(Nd),
                  res((H1, F * D)), res((H1, 1)),
                  res((H2, H1)), res((H2, 1)),
                  res((F, H2)), res((Nd, 1)), res((1, 1))],
        out_specs=pl.BlockSpec((1, tile_b), lambda i: (0, i)),
        compiler_params=pltpu.CompilerParams(
            dimension_semantics=("parallel",),
            vmem_limit_bytes=48 * 1024 * 1024),
    )(emb_t, lin_t, dense_t, w1t, b1, w2t, b2, pt, dense_w, bias)

    return out[0, :B]


def init_params(key, sparse_nums, n_dense, embed_dim, fen_layers):
    F = len(sparse_nums)
    D = embed_dim
    H1, H2 = fen_layers
    keys = jax.random.split(key, 6)
    total = sum(sparse_nums)
    offsets = [0]
    for n in sparse_nums[:-1]:
        offsets.append(offsets[-1] + n)
    return {
        # fused per-field tables (row ranges per field via field_offsets)
        "embed_table": 0.1 * jax.random.normal(keys[0], (total, D), jnp.float32),
        "lin_table": 0.1 * jax.random.normal(keys[1], (total,), jnp.float32),
        "field_offsets": jnp.array(offsets, jnp.int32),
        # FEN MLP + projection
        "w1": 0.1 * jax.random.normal(keys[2], (F * D, H1), jnp.float32),
        "b1": jnp.zeros((H1,), jnp.float32),
        "w2": 0.1 * jax.random.normal(keys[3], (H1, H2), jnp.float32),
        "b2": jnp.zeros((H2,), jnp.float32),
        "P": 0.1 * jax.random.normal(keys[4], (H2, F), jnp.float32),
        # IFM linear dense weights + top-level bias
        "dense_w": 0.1 * jax.random.normal(keys[5], (n_dense,), jnp.float32),
        "bias": jnp.zeros((1,), jnp.float32),
    }


if __name__ == "__main__":
    key = jax.random.PRNGKey(0)
    B = 8
    sparse_nums = [10, 20, 30, 40]   # 4 sparse fields
    F = len(sparse_nums)
    n_dense = 2
    embed_dim = 8
    fen_layers = [32, 16]

    kp, ks, kd = jax.random.split(key, 3)
    params = init_params(kp, sparse_nums, n_dense, embed_dim, fen_layers)

    sparse_idx = jnp.stack(
        [jax.random.randint(jax.random.fold_in(ks, f), (B,), 0, sparse_nums[f])
         for f in range(F)], axis=1).astype(jnp.int32)                 # [B, F]
    dense_vals = jax.random.normal(kd, (B, n_dense), jnp.float32)      # [B, Nd]

    out = ifm_forward(params, sparse_idx, dense_vals)
    jax.block_until_ready(out)
    assert out.shape == (B,)
    assert bool(jnp.all(jnp.isfinite(out)))
    print("KERNEL_OK")
</pallas_src>

<mosaic_0001>
module attributes {stable_mosaic.version = 11 : i64} {
  func.func @ifm_kernel(%arg0: i32, %arg1: memref<32x128xbf16, #tpu.memory_space<vmem>>, %arg2: memref<4x128xbf16, #tpu.memory_space<vmem>>, %arg3: memref<2x128xf32, #tpu.memory_space<vmem>>, %arg4: memref<32x32xbf16, #tpu.memory_space<vmem>>, %arg5: memref<32x1xf32, #tpu.memory_space<vmem>>, %arg6: memref<16x32xbf16, #tpu.memory_space<vmem>>, %arg7: memref<16x1xf32, #tpu.memory_space<vmem>>, %arg8: memref<4x16xbf16, #tpu.memory_space<vmem>>, %arg9: memref<2x1xf32, #tpu.memory_space<vmem>>, %arg10: memref<1x1xf32, #tpu.memory_space<vmem>>, %arg11: memref<1x128xf32, #tpu.memory_space<vmem>>) attributes {dimension_semantics = [#tpu.dimension_semantics<parallel>], iteration_bounds = array<i64: 1>, scalar_prefetch = 0 : i64, scratch_operands = 0 : i64, tpu.core_type = #tpu.core_type<tc>, window_params = [{transform_indices = @transform_0, window_bounds = array<i64: 32, 128>}, {transform_indices = @transform_1, window_bounds = array<i64: 4, 128>}, {transform_indices = @transform_2, window_bounds = array<i64: 2, 128>}, {pipeline_mode = #tpu.pipeline_mode<synchronous>, transform_indices = @transform_3, window_bounds = array<i64: 32, 32>}, {pipeline_mode = #tpu.pipeline_mode<synchronous>, transform_indices = @transform_4, window_bounds = array<i64: 32, 1>}, {pipeline_mode = #tpu.pipeline_mode<synchronous>, transform_indices = @transform_5, window_bounds = array<i64: 16, 32>}, {pipeline_mode = #tpu.pipeline_mode<synchronous>, transform_indices = @transform_6, window_bounds = array<i64: 16, 1>}, {pipeline_mode = #tpu.pipeline_mode<synchronous>, transform_indices = @transform_7, window_bounds = array<i64: 4, 16>}, {pipeline_mode = #tpu.pipeline_mode<synchronous>, transform_indices = @transform_8, window_bounds = array<i64: 2, 1>}, {pipeline_mode = #tpu.pipeline_mode<synchronous>, transform_indices = @transform_9, window_bounds = array<i64: 1, 1>}, {transform_indices = @transform_10, window_bounds = array<i64: 1, 128>}]} {
    %c0 = arith.constant 0 : index
    %c0_0 = arith.constant 0 : index
    %0 = vector.load %arg1[%c0, %c0_0] : memref<32x128xbf16, #tpu.memory_space<vmem>>, vector<32x128xbf16>
    %1 = arith.extf %0 : vector<32x128xbf16> to vector<32x128xf32>
    %c0_1 = arith.constant 0 : index
    %c0_2 = arith.constant 0 : index
    %2 = vector.load %arg4[%c0_1, %c0_2] : memref<32x32xbf16, #tpu.memory_space<vmem>>, vector<32x32xbf16>
    %cst = arith.constant dense<0.000000e+00> : vector<32x128xf32>
    %3 = tpu.matmul %2, %0, %cst {dimension_numbers = #tpu.dot_dimension_numbers<[1], [0], [0], [1], [0, 0, 1, 1], [], []>} : vector<32x32xbf16>, vector<32x128xbf16>, vector<32x128xf32> -> vector<32x128xf32>
    %c0_3 = arith.constant 0 : index
    %c0_4 = arith.constant 0 : index
    %4 = vector.load %arg5[%c0_3, %c0_4] : memref<32x1xf32, #tpu.memory_space<vmem>>, vector<32x1xf32>
    %5 = vector.broadcast %4 : vector<32x1xf32> to vector<32x128xf32>
    %6 = arith.addf %3, %5 : vector<32x128xf32>
    %cst_5 = arith.constant 0.000000e+00 : f32
    %7 = vector.broadcast %cst_5 : f32 to vector<32x128xf32>
    %8 = arith.maximumf %6, %7 : vector<32x128xf32>
    %c0_6 = arith.constant 0 : index
    %c0_7 = arith.constant 0 : index
    %9 = vector.load %arg6[%c0_6, %c0_7] : memref<16x32xbf16, #tpu.memory_space<vmem>>, vector<16x32xbf16>
    %10 = arith.truncf %8 : vector<32x128xf32> to vector<32x128xbf16>
    %cst_8 = arith.constant dense<0.000000e+00> : vector<16x128xf32>
    %11 = tpu.matmul %9, %10, %cst_8 {dimension_numbers = #tpu.dot_dimension_numbers<[1], [0], [0], [1], [0, 0, 1, 1], [], []>} : vector<16x32xbf16>, vector<32x128xbf16>, vector<16x128xf32> -> vector<16x128xf32>
    %c0_9 = arith.constant 0 : index
    %c0_10 = arith.constant 0 : index
    %12 = vector.load %arg7[%c0_9, %c0_10] : memref<16x1xf32, #tpu.memory_space<vmem>>, vector<16x1xf32>
    %13 = vector.broadcast %12 : vector<16x1xf32> to vector<16x128xf32>
    %14 = arith.addf %11, %13 : vector<16x128xf32>
    %cst_11 = arith.constant 0.000000e+00 : f32
    %15 = vector.broadcast %cst_11 : f32 to vector<16x128xf32>
    %16 = arith.maximumf %14, %15 : vector<16x128xf32>
    %c0_12 = arith.constant 0 : index
    %c0_13 = arith.constant 0 : index
    %17 = vector.load %arg8[%c0_12, %c0_13] : memref<4x16xbf16, #tpu.memory_space<vmem>>, vector<4x16xbf16>
    %18 = arith.truncf %16 : vector<16x128xf32> to vector<16x128xbf16>
    %cst_14 = arith.constant dense<0.000000e+00> : vector<4x128xf32>
    %19 = tpu.matmul %17, %18, %cst_14 {dimension_numbers = #tpu.dot_dimension_numbers<[1], [0], [0], [1], [0, 0, 1, 1], [], []>} : vector<4x16xbf16>, vector<16x128xbf16>, vector<4x128xf32> -> vector<4x128xf32>
    %cst_15 = arith.constant dense<0xFF800000> : vector<128xf32>
    %20 = vector.multi_reduction <maximumf>, %19, %cst_15 [0] : vector<4x128xf32> to vector<128xf32>
    %21 = vector.shape_cast %20 : vector<128xf32> to vector<1x128xf32>
    %22 = vector.broadcast %21 : vector<1x128xf32> to vector<4x128xf32>
    %23 = arith.subf %19, %22 : vector<4x128xf32>
    %24 = math.exp %23 : vector<4x128xf32>
    %cst_16 = arith.constant dense<0.000000e+00> : vector<128xf32>
    %25 = vector.multi_reduction <add>, %24, %cst_16 [0] : vector<4x128xf32> to vector<128xf32>
    %26 = vector.shape_cast %25 : vector<128xf32> to vector<1x128xf32>
    %27 = tpu.reciprocal %26 {approx = true} : vector<1x128xf32> -> vector<1x128xf32>
    %cst_17 = arith.constant 4.000000e+00 : f32
    %28 = vector.broadcast %cst_17 : f32 to vector<4x128xf32>
    %29 = arith.mulf %28, %24 : vector<4x128xf32>
    %30 = vector.broadcast %27 : vector<1x128xf32> to vector<4x128xf32>
    %31 = arith.mulf %29, %30 : vector<4x128xf32>
    %cst_18 = arith.constant 0.000000e+00 : f32
    %32 = vector.broadcast %cst_18 : f32 to vector<8x128xf32>
    %cst_19 = arith.constant 0.000000e+00 : f32
    %33 = vector.broadcast %cst_19 : f32 to vector<8x128xf32>
    %34 = vector.extract_strided_slice %31 {offsets = [0, 0], sizes = [1, 128], strides = [1, 1]} : vector<4x128xf32> to vector<1x128xf32>
    %35 = vector.extract_strided_slice %1 {offsets = [0, 0], sizes = [8, 128], strides = [1, 1]} : vector<32x128xf32> to vector<8x128xf32>
    %36 = vector.broadcast %34 : vector<1x128xf32> to vector<8x128xf32>
    %37 = arith.mulf %36, %35 : vector<8x128xf32>
    %38 = arith.addf %32, %37 : vector<8x128xf32>
    %39 = arith.mulf %37, %37 : vector<8x128xf32>
    %40 = arith.addf %33, %39 : vector<8x128xf32>
    %41 = vector.extract_strided_slice %31 {offsets = [1, 0], sizes = [1, 128], strides = [1, 1]} : vector<4x128xf32> to vector<1x128xf32>
    %42 = vector.extract_strided_slice %1 {offsets = [8, 0], sizes = [8, 128], strides = [1, 1]} : vector<32x128xf32> to vector<8x128xf32>
    %43 = vector.broadcast %41 : vector<1x128xf32> to vector<8x128xf32>
    %44 = arith.mulf %43, %42 : vector<8x128xf32>
    %45 = arith.addf %38, %44 : vector<8x128xf32>
    %46 = arith.mulf %44, %44 : vector<8x128xf32>
    %47 = arith.addf %40, %46 : vector<8x128xf32>
    %48 = vector.extract_strided_slice %31 {offsets = [2, 0], sizes = [1, 128], strides = [1, 1]} : vector<4x128xf32> to vector<1x128xf32>
    %49 = vector.extract_strided_slice %1 {offsets = [16, 0], sizes = [8, 128], strides = [1, 1]} : vector<32x128xf32> to vector<8x128xf32>
    %50 = vector.broadcast %48 : vector<1x128xf32> to vector<8x128xf32>
    %51 = arith.mulf %50, %49 : vector<8x128xf32>
    %52 = arith.addf %45, %51 : vector<8x128xf32>
    %53 = arith.mulf %51, %51 : vector<8x128xf32>
    %54 = arith.addf %47, %53 : vector<8x128xf32>
    %55 = vector.extract_strided_slice %31 {offsets = [3, 0], sizes = [1, 128], strides = [1, 1]} : vector<4x128xf32> to vector<1x128xf32>
    %56 = vector.extract_strided_slice %1 {offsets = [24, 0], sizes = [8, 128], strides = [1, 1]} : vector<32x128xf32> to vector<8x128xf32>
    %57 = vector.broadcast %55 : vector<1x128xf32> to vector<8x128xf32>
    %58 = arith.mulf %57, %56 : vector<8x128xf32>
    %59 = arith.addf %52, %58 : vector<8x128xf32>
    %60 = arith.mulf %58, %58 : vector<8x128xf32>
    %61 = arith.addf %54, %60 : vector<8x128xf32>
    %62 = arith.mulf %59, %59 : vector<8x128xf32>
    %63 = arith.subf %62, %61 : vector<8x128xf32>
    %cst_20 = arith.constant dense<0.000000e+00> : vector<128xf32>
    %64 = vector.multi_reduction <add>, %63, %cst_20 [0] : vector<8x128xf32> to vector<128xf32>
    %65 = vector.shape_cast %64 : vector<128xf32> to vector<1x128xf32>
    %cst_21 = arith.constant 5.000000e-01 : f32
    %66 = vector.broadcast %cst_21 : f32 to vector<1x128xf32>
    %67 = arith.mulf %66, %65 : vector<1x128xf32>
    %c0_22 = arith.constant 0 : index
    %c0_23 = arith.constant 0 : index
    %68 = vector.load %arg2[%c0_22, %c0_23] : memref<4x128xbf16, #tpu.memory_space<vmem>>, vector<4x128xbf16>
    %69 = arith.extf %68 : vector<4x128xbf16> to vector<4x128xf32>
    %70 = arith.mulf %69, %31 : vector<4x128xf32>
    %cst_24 = arith.constant dense<0.000000e+00> : vector<128xf32>
    %71 = vector.multi_reduction <add>, %70, %cst_24 [0] : vector<4x128xf32> to vector<128xf32>
    %72 = vector.shape_cast %71 : vector<128xf32> to vector<1x128xf32>
    %c0_25 = arith.constant 0 : index
    %c0_26 = arith.constant 0 : index
    %73 = vector.load %arg3[%c0_25, %c0_26] : memref<2x128xf32, #tpu.memory_space<vmem>>, vector<2x128xf32>
    %c0_27 = arith.constant 0 : index
    %c0_28 = arith.constant 0 : index
    %74 = vector.load %arg9[%c0_27, %c0_28] : memref<2x1xf32, #tpu.memory_space<vmem>>, vector<2x1xf32>
    %75 = vector.broadcast %74 : vector<2x1xf32> to vector<2x128xf32>
    %76 = arith.mulf %73, %75 : vector<2x128xf32>
    %cst_29 = arith.constant dense<0.000000e+00> : vector<128xf32>
    %77 = vector.multi_reduction <add>, %76, %cst_29 [0] : vector<2x128xf32> to vector<128xf32>
    %78 = vector.shape_cast %77 : vector<128xf32> to vector<1x128xf32>
    %79 = arith.addf %72, %78 : vector<1x128xf32>
    %80 = arith.addf %79, %67 : vector<1x128xf32>
    %c0_30 = arith.constant 0 : index
    %c0_31 = arith.constant 0 : index
    %81 = vector.load %arg10[%c0_30, %c0_31] : memref<1x1xf32, #tpu.memory_space<vmem>>, vector<1x1xf32>
    %82 = vector.broadcast %81 : vector<1x1xf32> to vector<1x128xf32>
    %83 = arith.addf %80, %82 : vector<1x128xf32>
    %c0_32 = arith.constant 0 : index
    %c0_33 = arith.constant 0 : index
    %84 = vector.load %arg11[%c0_32, %c0_33] : memref<1x128xf32, #tpu.memory_space<vmem>>, vector<1x128xf32>
    tpu.vector_store %arg11[%c0_32, %c0_33], %83 {strides = array<i32>} : memref<1x128xf32, #tpu.memory_space<vmem>>, vector<1x128xf32>,
    return
  }
  func.func @transform_0(%arg0: i32) -> (i32, i32) {
    %c0_i32 = arith.constant 0 : i32
    %c0_i32_0 = arith.constant 0 : i32
    return %c0_i32, %arg0 : i32, i32
  }
  func.func @transform_1(%arg0: i32) -> (i32, i32) {
    %c0_i32 = arith.constant 0 : i32
    %c0_i32_0 = arith.constant 0 : i32
    return %c0_i32, %arg0 : i32, i32
  }
  func.func @transform_2(%arg0: i32) -> (i32, i32) {
    %c0_i32 = arith.constant 0 : i32
    %c0_i32_0 = arith.constant 0 : i32
    return %c0_i32, %arg0 : i32, i32
  }
  func.func @transform_3(%arg0: i32) -> (i32, i32) {
    %c0_i32 = arith.constant 0 : i32
    %c0_i32_0 = arith.constant 0 : i32
    %c0_i32_1 = arith.constant 0 : i32
    return %c0_i32, %c0_i32_0 : i32, i32
  }
  func.func @transform_4(%arg0: i32) -> (i32, i32) {
    %c0_i32 = arith.constant 0 : i32
    %c0_i32_0 = arith.constant 0 : i32
    %c0_i32_1 = arith.constant 0 : i32
    return %c0_i32, %c0_i32_0 : i32, i32
  }
  func.func @transform_5(%arg0: i32) -> (i32, i32) {
    %c0_i32 = arith.constant 0 : i32
    %c0_i32_0 = arith.constant 0 : i32
    %c0_i32_1 = arith.constant 0 : i32
    return %c0_i32, %c0_i32_0 : i32, i32
  }
  func.func @transform_6(%arg0: i32) -> (i32, i32) {
    %c0_i32 = arith.constant 0 : i32
    %c0_i32_0 = arith.constant 0 : i32
    %c0_i32_1 = arith.constant 0 : i32
    return %c0_i32, %c0_i32_0 : i32, i32
  }
  func.func @transform_7(%arg0: i32) -> (i32, i32) {
    %c0_i32 = arith.constant 0 : i32
    %c0_i32_0 = arith.constant 0 : i32
    %c0_i32_1 = arith.constant 0 : i32
    return %c0_i32, %c0_i32_0 : i32, i32
  }
  func.func @transform_8(%arg0: i32) -> (i32, i32) {
    %c0_i32 = arith.constant 0 : i32
    %c0_i32_0 = arith.constant 0 : i32
    %c0_i32_1 = arith.constant 0 : i32
    return %c0_i32, %c0_i32_0 : i32, i32
  }
  func.func @transform_9(%arg0: i32) -> (i32, i32) {
    %c0_i32 = arith.constant 0 : i32
    %c0_i32_0 = arith.constant 0 : i32
    %c0_i32_1 = arith.constant 0 : i32
    return %c0_i32, %c0_i32_0 : i32, i32
  }
  func.func @transform_10(%arg0: i32) -> (i32, i32) {
    %c0_i32 = arith.constant 0 : i32
    %c0_i32_0 = arith.constant 0 : i32
    return %c0_i32, %arg0 : i32, i32
  }
}

</mosaic_0001>

<llo_original>
// kernel: tpu_custom_call.1
$region0: #{tpu_custom_call.1}
  #allocation0 [shape = 'u32[]', space=smem, size = 0x4, offset = 0x4, fixed_abs, tag = 'smem constant byte address 0x4 - core index']
  #allocation1 [shape = 'u32[144,128]{1,0:T(1,128)}', space=vmem, size = 0x12000, scoped, tag = 'internal scratch']
  #allocation2 [shape = 'f32[1,1]{1,0:T(1,128)S(1)}', space=vmem, size = 0x200, scoped, tag = 'scoped memory for tpu_custom_call.1']
  %s0 = inlined_call_operand.vmem [shape: bf16[32,128], index: 0, kind: input, shape index: {}]
  %s1 = inlined_call_operand.vmem [shape: bf16[4,128], index: 1, kind: input, shape index: {}]
  %s2 = inlined_call_operand.vmem [shape: f32[2,128], index: 2, kind: input, shape index: {}]
  %s3 = inlined_call_operand.vmem [shape: bf16[32,32], index: 3, kind: input, shape index: {}]
  %s4 = inlined_call_operand.vmem [shape: f32[32,1], index: 4, kind: input, shape index: {}]
  %s5 = inlined_call_operand.vmem [shape: bf16[16,32], index: 5, kind: input, shape index: {}]
  %s6 = inlined_call_operand.vmem [shape: f32[16,1], index: 6, kind: input, shape index: {}]
  %s7 = inlined_call_operand.vmem [shape: bf16[4,16], index: 7, kind: input, shape index: {}]
  %s8 = inlined_call_operand.vmem [shape: f32[2,1], index: 8, kind: input, shape index: {}]
  %s9 = inlined_call_operand.<no memory space> [shape: f32[1,1], index: 9, kind: input, shape index: {}]
  %s10 = inlined_call_operand.hbm [shape: f32[1,128], index: 10, kind: output, shape index: {}]
  %s11 = sld [smem:[#allocation0]]
  $region50: #{tpu_custom_call.1} parent=0
    _
  %s13 = ssub.s32 1, %s11
  %s14 = scalar_select 0, %s13, %s11
  %v15 = vstv %s9
  %16 = vst [vmem:[#allocation2] sm:$0x1] %v15
  $region1: #{tpu_custom_call.1} parent=0
    #allocation3 [shape = 'u8[512]{0}', space=vmem, size = 0x400, scoped, tag = 'output window, operand 0, single buffered']
    #allocation4 [shape = 's32[1]{0}', space=sflag, size = 0x4, scoped, tag = 'scoped memory for tpu_custom_call.1']
    %17 = vsyncpa [#allocation4], 0
    // Predicated region
    $region2: #{tpu_custom_call.1} parent=1 // pred_check
      _
    $region3: #{tpu_custom_call.1} parent=1 // pred_check_branch
      %19 = sbr.rel (0) target = $region5
    $region4: #{tpu_custom_call.1} parent=1 // pred_region
      _
    $region5: #{tpu_custom_call.1} parent=1 // pred_fallthru
      _
    // Predicated region
    $region6: #{tpu_custom_call.1} parent=1 // pred_check
      _
    $region7: #{tpu_custom_call.1} parent=1 // pred_check_branch
      %21 = sbr.rel (0) target = $region9
    $region8: #{tpu_custom_call.1} parent=1 // pred_region
      _
    $region9: #{tpu_custom_call.1} parent=1 // pred_fallthru
      _
    // Predicated region
    $region10: #{tpu_custom_call.1} parent=1 // pred_check
      _
    $region11: #{tpu_custom_call.1} parent=1 // pred_check_branch
      %23 = sbr.rel (0) target = $region13
    $region12: #{tpu_custom_call.1} parent=1 // pred_region
      _
    $region13: #{tpu_custom_call.1} parent=1 // pred_fallthru
      _
    // Predicated region
    $region14: #{tpu_custom_call.1} parent=1 // pred_check
      _
    $region15: #{tpu_custom_call.1} parent=1 // pred_check_branch
      %25 = sbr.rel (0) target = $region17
    $region16: #{tpu_custom_call.1} parent=1 // pred_region
      _
    $region17: #{tpu_custom_call.1} parent=1 // pred_fallthru
      _
    // Predicated region
    $region18: #{tpu_custom_call.1} parent=1 // pred_check
      _
    $region19: #{tpu_custom_call.1} parent=1 // pred_check_branch
      %27 = sbr.rel (0) target = $region21
    $region20: #{tpu_custom_call.1} parent=1 // pred_region
      _
    $region21: #{tpu_custom_call.1} parent=1 // pred_fallthru
      _
    // Predicated region
    $region22: #{tpu_custom_call.1} parent=1 // pred_check
      _
    $region23: #{tpu_custom_call.1} parent=1 // pred_check_branch
      %29 = sbr.rel (0) target = $region25
    $region24: #{tpu_custom_call.1} parent=1 // pred_region
      _
    $region25: #{tpu_custom_call.1} parent=1 // pred_fallthru
      _
    // Predicated region
    $region26: #{tpu_custom_call.1} parent=1 // pred_check
      _
    $region27: #{tpu_custom_call.1} parent=1 // pred_check_branch
      %31 = sbr.rel (0) target = $region29
    $region28: #{tpu_custom_call.1} parent=1 // pred_region
      _
    $region29: #{tpu_custom_call.1} parent=1 // pred_fallthru
      _
    // Predicated region
    $region30: #{tpu_custom_call.1} parent=1 // pred_check
      _
    $region31: #{tpu_custom_call.1} parent=1 // pred_check_branch
      %33 = sbr.rel (0) target = $region33
    $region32: #{tpu_custom_call.1} parent=1 // pred_region
      _
    $region33: #{tpu_custom_call.1} parent=1 // pred_fallthru
      _
    // Predicated region
    $region34: #{tpu_custom_call.1} parent=1 // pred_check
      _
    $region35: #{tpu_custom_call.1} parent=1 // pred_check_branch
      %35 = sbr.rel (0) target = $region37
    $region36: #{tpu_custom_call.1} parent=1 // pred_region
      _
    $region37: #{tpu_custom_call.1} parent=1 // pred_fallthru
      _
    // Predicated region
    $region38: #{tpu_custom_call.1} parent=1 // pred_check
      _
    $region39: #{tpu_custom_call.1} parent=1 // pred_check_branch
      %37 = sbr.rel (0) target = $region41
    $region40: #{tpu_custom_call.1} parent=1 // pred_region
      _
    $region41: #{tpu_custom_call.1} parent=1 // pred_fallthru
      _
    %v39 = vld [vmem:[%s0] sm:$0xf]
    %v40 = vld [vmem:[%s0 + $0x4] sm:$0xf]
    %v41 = vld [vmem:[%s0 + $0x8] sm:$0xf]
    %v42 = vld [vmem:[%s0 + $0xc] sm:$0xf]
    %v43 = vunpack.c.l.bf16 %v39
    %v44 = vunpack.c.l.bf16 %v40
    %v45 = vunpack.c.l.bf16 %v41
    %v46 = vunpack.c.l.bf16 %v42
    %v47 = vld [vmem:[%s3] sm:$0xf]
    %v48 = vld [vmem:[%s3 + $0x4] sm:$0xf]
    %v49 = vld [vmem:[%s3 + $0x8] sm:$0xf]
    %v50 = vld [vmem:[%s3 + $0xc] sm:$0xf]
    %v51 = vld [vmem:[%s4] sm:$0xff]
    %v52 = vld [vmem:[%s4 + $0x8] sm:$0xff]
    %v53 = vld [vmem:[%s4 + $0x10] sm:$0xff]
    %v54 = vld [vmem:[%s4 + $0x18] sm:$0xff]
    %56 = vset.pattern.permute.xlu0 0
    %57 = vperm.xlu0 %56, %v51
    %v58 = vpop.permute.xlu0 %57
    %61 = vset.pattern.permute.xlu0 0
    %62 = vperm.xlu0 %61, %v52
    %v63 = vpop.permute.xlu0 %62
    %66 = vset.pattern.permute.xlu0 0
    %67 = vperm.xlu0 %66, %v53
    %v68 = vpop.permute.xlu0 %67
    %71 = vset.pattern.permute.xlu0 0
    %72 = vperm.xlu0 %71, %v54
    %v73 = vpop.permute.xlu0 %72
    %v79 = vunpack.c.l.b16 %v47
    %v80 = vunpack.c.l.b16 %v48
    %v81 = vunpack.c.l.b16 %v49
    %v82 = vunpack.c.l.b16 %v50
    %v83 = vpack.c.b16 %v80, %v79
    %v84 = vpack.c.b16 %v82, %v81
    %v89 = vunpack.c.l.b16 %v39
    %v90 = vunpack.c.l.b16 %v40
    %v91 = vunpack.c.l.b16 %v41
    %v92 = vunpack.c.l.b16 %v42
    %v93 = vpack.c.b16 %v90, %v89
    %v94 = vpack.c.b16 %v92, %v91
    %vm97 = vcmask 261120
    %v99 = vsel %vm97, %v83, 0
    %v102 = vsel %vm97, %v84, 0
    %104 = vmatprep.subr.bf16.mxu0 0
    %105 = vmatpush1.bf16.msra.mxu0 0
    %106 = vmatprep.subr.bf16.mxu0 0
    %107 = vmatpush1.bf16.msra.mxu0 0
    %108 = vmatprep.subr.bf16.mxu0 0
    %109 = vmatpush1.bf16.msra.mxu0 0
    %110 = vmatprep.subr.bf16.mxu0 0
    %111 = vmatpush1.bf16.msra.mxu0 0
    %112 = vmatprep.subr.bf16.mxu0 0
    %113 = vmatpush1.bf16.msra.mxu0 0
    %114 = vmatprep.subr.bf16.mxu0 0
    %115 = vmatpush1.bf16.msra.mxu0 0
    %116 = vmatprep.subr.bf16.mxu0 0
    %117 = vmatpush1.bf16.msra.mxu0 %v94
    %118 = vmatprep.subr.bf16.mxu0 0
    %119 = vmatpush1.bf16.msra.mxu0 %v93
    %120 = vmatprep.subr.bf16.mxu0 0
    %121 = vmatpush2.bf16.msra.mxu0 0
    %122 = vmatprep.subr.bf16.mxu0 0
    %123 = vmatpush2.bf16.msra.mxu0 0
    %124 = vmatprep.subr.bf16.mxu0 0
    %125 = vmatpush2.bf16.msra.mxu0 0
    %126 = vmatprep.subr.bf16.mxu0 0
    %127 = vmatpush2.bf16.msra.mxu0 0
    %128 = vmatprep.subr.bf16.mxu0 0
    %129 = vmatpush2.bf16.msra.mxu0 0
    %130 = vmatprep.subr.bf16.mxu0 0
    %131 = vmatpush2.bf16.msra.mxu0 0
    %132 = vmatprep.subr.bf16.mxu0 0
    %133 = vmatpush2.bf16.msra.mxu0 0
    %134 = vmatprep.subr.bf16.mxu0 0
    %135 = vmatpush2.bf16.msra.mxu0 0
    %136 = vmatprep.mubr.bf16.mxu0 0
    %137 = vmatmul.mubr.bf16.gmra.mxu0 %v99
    %v138 = vpop.f32.mrf.mxu0
    %v139 = vadd.f32 %v58, %v138
    %v140 = vpop.f32.mrf.mxu0
    %v141 = vpop.f32.mrf.mxu0
    %v142 = vadd.f32 %v63, %v141
    %v143 = vpop.f32.mrf.mxu0
    %144 = vmatprep.mubr.bf16.mxu0 0
    %145 = vmatmul.mubr.bf16.gmra.mxu0 %v102
    %v146 = vpop.f32.mrf.mxu0
    %v147 = vadd.f32 %v68, %v146
    %v148 = vpop.f32.mrf.mxu0
    %v149 = vpop.f32.mrf.mxu0
    %v150 = vadd.f32 %v73, %v149
    %v151 = vpop.f32.mrf.mxu0
    %152 = vdwg.mxu0
    %v153 = vmax.f32 %v139, 0.0
    %v154 = vmax.f32 %v142, 0.0
    %v155 = vmax.f32 %v147, 0.0
    %v156 = vmax.f32 %v150, 0.0
    %v157 = vld [vmem:[%s5] sm:$0xf]
    %v158 = vld [vmem:[%s5 + $0x4] sm:$0xf]
    %v159 = vpack.c.bf16 %v154, %v153
    %v160 = vpack.c.bf16 %v156, %v155
    %v161 = vld [vmem:[%s6] sm:$0xff]
    %v162 = vld [vmem:[%s6 + $0x8] sm:$0xff]
    %164 = vset.pattern.permute.xlu0 0
    %165 = vperm.xlu0 %164, %v161
    %v166 = vpop.permute.xlu0 %165
    %169 = vset.pattern.permute.xlu0 0
    %170 = vperm.xlu0 %169, %v162
    %v171 = vpop.permute.xlu0 %170
    %v175 = vunpack.c.l.b16 %v157
    %v176 = vunpack.c.l.b16 %v158
    %v177 = vpack.c.b16 %v176, %v175
    %v179 = vsel %vm97, %v177, 0
    %181 = vmatprep.subr.bf16.mxu0 0
    %182 = vmatpush1.bf16.msra.mxu0 0
    %183 = vmatprep.subr.bf16.mxu0 0
    %184 = vmatpush1.bf16.msra.mxu0 0
    %185 = vmatprep.subr.bf16.mxu0 0
    %186 = vmatpush1.bf16.msra.mxu0 0
    %187 = vmatprep.subr.bf16.mxu0 0
    %188 = vmatpush1.bf16.msra.mxu0 0
    %189 = vmatprep.subr.bf16.mxu0 0
    %190 = vmatpush1.bf16.msra.mxu0 0
    %191 = vmatprep.subr.bf16.mxu0 0
    %192 = vmatpush1.bf16.msra.mxu0 0
    %193 = vmatprep.subr.bf16.mxu0 0
    %194 = vmatpush1.bf16.msra.mxu0 %v160
    %195 = vmatprep.subr.bf16.mxu0 0
    %196 = vmatpush1.bf16.msra.mxu0 %v159
    %197 = vmatprep.subr.bf16.mxu0 0
    %198 = vmatpush2.bf16.msra.mxu0 0
    %199 = vmatprep.subr.bf16.mxu0 0
    %200 = vmatpush2.bf16.msra.mxu0 0
    %201 = vmatprep.subr.bf16.mxu0 0
    %202 = vmatpush2.bf16.msra.mxu0 0
    %203 = vmatprep.subr.bf16.mxu0 0
    %204 = vmatpush2.bf16.msra.mxu0 0
    %205 = vmatprep.subr.bf16.mxu0 0
    %206 = vmatpush2.bf16.msra.mxu0 0
    %207 = vmatprep.subr.bf16.mxu0 0
    %208 = vmatpush2.bf16.msra.mxu0 0
    %209 = vmatprep.subr.bf16.mxu0 0
    %210 = vmatpush2.bf16.msra.mxu0 0
    %211 = vmatprep.subr.bf16.mxu0 0
    %212 = vmatpush2.bf16.msra.mxu0 0
    %213 = vmatprep.mubr.bf16.mxu0 0
    %214 = vmatmul.mubr.bf16.gmra.mxu0 %v179
    %v215 = vpop.f32.mrf.mxu0
    %v216 = vadd.f32 %v166, %v215
    %v217 = vpop.f32.mrf.mxu0
    %v218 = vpop.f32.mrf.mxu0
    %v219 = vadd.f32 %v171, %v218
    %v220 = vpop.f32.mrf.mxu0
    %221 = vdwg.mxu0
    %v222 = vmax.f32 %v216, 0.0
    %v223 = vmax.f32 %v219, 0.0
    %v224 = vld [vmem:[%s7] sm:$0x3]
    %v225 = vpack.c.bf16 %v223, %v222
    %vm226 = vcmask 130048
    %v228 = vsel %vm226, %v224, 0
    %230 = vmatprep.subr.bf16.mxu0 0
    %231 = vmatpush1.bf16.msra.mxu0 0
    %232 = vmatprep.subr.bf16.mxu0 0
    %233 = vmatpush1.bf16.msra.mxu0 0
    %234 = vmatprep.subr.bf16.mxu0 0
    %235 = vmatpush1.bf16.msra.mxu0 0
    %236 = vmatprep.subr.bf16.mxu0 0
    %237 = vmatpush1.bf16.msra.mxu0 0
    %238 = vmatprep.subr.bf16.mxu0 0
    %239 = vmatpush1.bf16.msra.mxu0 0
    %240 = vmatprep.subr.bf16.mxu0 0
    %241 = vmatpush1.bf16.msra.mxu0 0
    %242 = vmatprep.subr.bf16.mxu0 0
    %243 = vmatpush1.bf16.msra.mxu0 0
    %244 = vmatprep.subr.bf16.mxu0 0
    %245 = vmatpush1.bf16.msra.mxu0 %v225
    %246 = vmatprep.subr.bf16.mxu0 0
    %247 = vmatpush2.bf16.msra.mxu0 0
    %248 = vmatprep.subr.bf16.mxu0 0
    %249 = vmatpush2.bf16.msra.mxu0 0
    %250 = vmatprep.subr.bf16.mxu0 0
    %251 = vmatpush2.bf16.msra.mxu0 0
    %252 = vmatprep.subr.bf16.mxu0 0
    %253 = vmatpush2.bf16.msra.mxu0 0
    %254 = vmatprep.subr.bf16.mxu0 0
    %255 = vmatpush2.bf16.msra.mxu0 0
    %256 = vmatprep.subr.bf16.mxu0 0
    %257 = vmatpush2.bf16.msra.mxu0 0
    %258 = vmatprep.subr.bf16.mxu0 0
    %259 = vmatpush2.bf16.msra.mxu0 0
    %260 = vmatprep.subr.bf16.mxu0 0
    %261 = vmatpush2.bf16.msra.mxu0 0
    %262 = vmatprep.mubr.bf16.mxu0 0
    %263 = vmatmul.mubr.bf16.gmra.mxu0 %v228
    %v264 = vpop.f32.mrf.mxu0
    %v265 = vadd.f32 0.0, %v264
    %v266 = vpop.f32.mrf.mxu0
    %v267 = vpop.f32.mrf.mxu0
    %v268 = vpop.f32.mrf.mxu0
    %269 = vdwg.mxu0
    %vm270 = vcmask 1043456
    %v271 = vsel %vm270, %v265, -inf
    %v272 = vrot.slane %v271, 4
    %v273 = vmax.f32 %v271, %v272
    %v274 = vrot.slane %v273, 2
    %v275 = vmax.f32 %v273, %v274
    %v276 = vrot.slane %v275, 1
    %v277 = vmax.f32 %v275, %v276
    %v278 = vsub.f32 %v265, %v277
    %v279 = vmul.f32 %v278, 1.442695
    %v280 = vpow.pop %v279
    %v281 = vsel %vm270, %v280, 0.0
    %v282 = vrot.slane %v281, 4
    %v283 = vadd.f32 %v281, %v282
    %v284 = vrot.slane %v283, 2
    %v285 = vadd.f32 %v283, %v284
    %v286 = vrot.slane %v285, 1
    %v287 = vadd.f32 %v285, %v286
    %v288 = vrcp.pop %v287
    %v289 = vmul.f32 %v280, 4.0
    %v290 = vmul.f32 %v289, %v288
    %v291 = vlaneseq
    %v292 = vshrl.u32 %v291, 7
    %v293 = vsub.s32 0, %v292
    %v294 = vrot.slane %v290, %v293
    %v295 = vmul.f32 %v294, %v43
    %v296 = vadd.f32 %v295, 0.0
    %v297 = vmul.f32 %v295, %v295
    %v298 = vadd.f32 %v297, 0.0
    %v299 = vlaneseq
    %v300 = vshrl.u32 %v299, 7
    %v301 = vsub.s32 1, %v300
    %v302 = vrot.slane %v290, %v301
    %v303 = vmul.f32 %v302, %v44
    %v304 = vadd.f32 %v296, %v303
    %v305 = vmul.f32 %v303, %v303
    %v306 = vadd.f32 %v298, %v305
    %v307 = vlaneseq
    %v308 = vshrl.u32 %v307, 7
    %v309 = vsub.s32 2, %v308
    %v310 = vrot.slane %v290, %v309
    %v311 = vmul.f32 %v310, %v45
    %v312 = vadd.f32 %v304, %v311
    %v313 = vmul.f32 %v311, %v311
    %v314 = vadd.f32 %v306, %v313
    %v315 = vlaneseq
    %v316 = vshrl.u32 %v315, 7
    %v317 = vsub.s32 3, %v316
    %v318 = vrot.slane %v290, %v317
    %v319 = vmul.f32 %v318, %v46
    %v320 = vadd.f32 %v312, %v319
    %v321 = vmul.f32 %v319, %v319
    %v322 = vadd.f32 %v314, %v321
    %v323 = vmul.f32 %v320, %v320
    %v324 = vsub.f32 %v323, %v322
    %v325 = vrot.slane %v324, 4
    %v326 = vadd.f32 %v324, %v325
    %v327 = vrot.slane %v326, 2
    %v328 = vadd.f32 %v326, %v327
    %v329 = vrot.slane %v328, 1
    %v330 = vadd.f32 %v328, %v329
    %v331 = vmul.f32 %v330, 0.5
    %v332 = vld [vmem:[%s1] sm:$0x3]
    %v333 = vunpack.c.l.bf16 %v332
    %v334 = vmul.f32 %v333, %v290
    %v335 = vsel %vm270, %v334, 0.0
    %v336 = vrot.slane %v335, 4
    %v337 = vadd.f32 %v335, %v336
    %v338 = vrot.slane %v337, 2
    %v339 = vadd.f32 %v337, %v338
    %v340 = vrot.slane %v339, 1
    %v341 = vadd.f32 %v339, %v340
    %v342 = vld [vmem:[%s2] sm:$0x3]
    %v343 = vld [vmem:[%s8] sm:$0x3]
    %345 = vset.pattern.permute.xlu0 0
    %346 = vperm.xlu0 %345, %v343
    %v347 = vpop.permute.xlu0 %346
    %v349 = vmul.f32 %v342, %v347
    %vm350 = vcmask 1041408
    %v351 = vsel %vm350, %v349, 0.0
    %v352 = vrot.slane %v351, 4
    %v353 = vadd.f32 %v351, %v352
    %v354 = vrot.slane %v353, 2
    %v355 = vadd.f32 %v353, %v354
    %v356 = vrot.slane %v355, 1
    %v357 = vadd.f32 %v355, %v356
    %v358 = vadd.f32 %v341, %v357
    %v359 = vadd.f32 %v358, %v331
    %v360 = vld [vmem:[#allocation2] sm:$0x1]
    %362 = vset.pattern.permute.xlu0 0
    %363 = vperm.xlu0 %362, %v360
    %v364 = vpop.permute.xlu0 %363
    %v366 = vlaneseq
    %v367 = vshrl.u32 %v366, 7
    %v368 = vsub.s32 0, %v367
    %v369 = vrot.slane %v364, %v368
    %v370 = vadd.f32 %v359, %v369
    %371 = vst [vmem:[#allocation3] sm:$0x1] %v370
    // Predicated region
    $region42: #{tpu_custom_call.1} parent=1 // pred_check
      _
    $region43: #{tpu_custom_call.1} parent=1 // pred_check_branch
      %373 = sbr.rel (0) target = $region45
    $region44: #{tpu_custom_call.1} parent=1 // pred_region
      %s375 = ssub.s32 16, 16
      %376 = vsyncadd [#allocation4], %s375
      %s378 = sshll.u32 [#allocation3], 4
      %s379 = int_to_ptr.vmem [resolvable:$true] %s378
      %381 = dma.vmem_to_hbm [thread:$0]  %s379, 16, %s10, [#allocation4]
    $region45: #{tpu_custom_call.1} parent=1 // pred_fallthru
      _
    // Predicated region
    $region46: #{tpu_custom_call.1} parent=1 // pred_check
      _
    $region47: #{tpu_custom_call.1} parent=1 // pred_check_branch
      %383 = sbr.rel (0) target = $region49
    $region48: #{tpu_custom_call.1} parent=1 // pred_region
      %384 = dma.done [#allocation4], 16
    $region49: #{tpu_custom_call.1} parent=1 // pred_fallthru
      _
    %385 = vsyncpa [#allocation4], 1

</llo_original>
